<compile_context>
chip_gen: v5e
topology: v5e:2x2
jax: 0.10.0
libtpu: 0.0.40
codegen_flags: <defaults>
</compile_context>

<pallas_src>
import jax
import jax.numpy as jnp
from jax.experimental import pallas as pl
from jax.experimental.pallas import tpu as pltpu


def _addrelu_kernel(x_ref, o_ref):
    x = x_ref[...]
    y = jnp.maximum(x + 1.0, 0.0)   # relu(x + 1)
    o_ref[...] = y + y              # x3 + x5, where x3 == x5 == relu(x + 1)


# itemsize -> sublane packing multiple (f32:8, bf16/fp16:16, int8/fp8:32)
_SUBLANE_PACK = {4: 8, 2: 16, 1: 32}

_LANES = 128
_VMEM_LIMIT_BYTES = 48 * 1024 * 1024   # safe on v5e/v6e (128 MiB) and v7x (64 MiB)
_SMALL_SLAB_BYTES = 2 * 1024 * 1024    # below this, a single block is fine
_MIN_BLOCKS = 8                        # >= 2 * num_cores on v7x -> pipelining + megacore


def _target_block_bytes():
    """Per-generation streaming block size (bytes)."""
    try:
        kind = jax.devices()[0].device_kind.lower()
    except Exception:
        kind = ""
    if "v7" in kind:
        return 8 * 1024 * 1024   # 3.2 TB/s HBM: bigger blocks amortize step overhead
    return 4 * 1024 * 1024       # >= 85% of HBM roofline on v5e/v6e per tile sweep


def _run_2d(slab):
    """Run the elementwise kernel over a lane-dense 2D slab (rows, 128)."""
    rows, lanes = slab.shape
    itemsize = slab.dtype.itemsize
    sub = _SUBLANE_PACK.get(itemsize, 8)

    slab_bytes = rows * lanes * itemsize
    target_bytes = _target_block_bytes()
    target_rows = max(sub, target_bytes // (lanes * itemsize))
    target_rows = max(sub, (target_rows // sub) * sub)   # sublane-pack aligned

    if slab_bytes <= _SMALL_SLAB_BYTES or rows <= 2 * sub:
        # Tiny/small input: single full-extent block (always a legal block shape).
        block_rows = rows
        grid = (1,)
    else:
        # Split into at least _MIN_BLOCKS blocks so the pipeline overlaps and
        # the parallel axis can shard across both v7x TensorCores, but never
        # exceed the per-generation target block size.
        rows_for_min = -(-rows // _MIN_BLOCKS)                 # cdiv
        rows_for_min = max(sub, -(-rows_for_min // sub) * sub)  # round up to pack
        block_rows = min(target_rows, rows_for_min)
        grid = (pl.cdiv(rows, block_rows),)   # ragged last block is masked by Pallas

    return pl.pallas_call(
        _addrelu_kernel,
        out_shape=jax.ShapeDtypeStruct((rows, lanes), slab.dtype),
        grid=grid,
        in_specs=[pl.BlockSpec((block_rows, lanes), lambda i: (i, 0))],
        out_specs=pl.BlockSpec((block_rows, lanes), lambda i: (i, 0)),
        compiler_params=pltpu.CompilerParams(
            dimension_semantics=("parallel",),
            vmem_limit_bytes=_VMEM_LIMIT_BYTES,
        ),
    )(slab)


@jax.jit
def model_forward(x):
    """x: float array (e.g. NCHW). Returns relu(x+1) + relu(x+1)."""
    orig_shape = x.shape
    total = x.size

    if total % _LANES == 0:
        # Lane-dense slab: last dim maps exactly onto the 128-lane vreg axis
        # -> unmasked vector stores. Pure reshape, no HBM copy.
        slab = x.reshape(total // _LANES, _LANES)
        return _run_2d(slab).reshape(orig_shape)

    # Unaligned total: run the 128-aligned prefix through the lane-dense kernel
    # and compute the <128-element tail with plain XLA ops, then stitch back.
    flat = x.reshape(total)
    aligned = (total // _LANES) * _LANES

    if aligned == 0:
        # Fewer than 128 elements: kernel launch overhead dominates; pure XLA.
        y = jnp.maximum(flat + 1.0, 0.0)
        return (y + y).reshape(orig_shape)

    head = _run_2d(flat[:aligned].reshape(aligned // _LANES, _LANES)).reshape(aligned)
    tail = flat[aligned:]
    t = jnp.maximum(tail + 1.0, 0.0)
    tail_out = t + t
    return jnp.concatenate([head, tail_out]).reshape(orig_shape)


if __name__ == "__main__":
    key = jax.random.PRNGKey(0)

    # Small NCHW input consistent with the module (original was (1, 3, 128, 128)).
    x1 = jax.random.normal(key, (2, 4, 16, 16), dtype=jnp.float32)
    out = model_forward(x1)
    jax.block_until_ready(out)
    ref = jnp.maximum(x1 + 1.0, 0.0) * 2.0
    assert out.shape == x1.shape
    assert jnp.allclose(out, ref, atol=1e-6), "mismatch vs reference"

    # Non-multiple-of-128 with an aligned prefix + tail (prefix/tail split path).
    x2 = jax.random.normal(jax.random.PRNGKey(1), (1, 3, 11, 13), dtype=jnp.float32)
    out2 = model_forward(x2)
    jax.block_until_ready(out2)
    ref2 = jnp.maximum(x2 + 1.0, 0.0) * 2.0
    assert out2.shape == x2.shape
    assert jnp.allclose(out2, ref2, atol=1e-6), "mismatch vs reference (prefix+tail)"

    # Fewer than 128 elements (pure-XLA tiny path).
    x3 = jax.random.normal(jax.random.PRNGKey(2), (1, 3, 5, 7), dtype=jnp.float32)
    out3 = model_forward(x3)
    jax.block_until_ready(out3)
    ref3 = jnp.maximum(x3 + 1.0, 0.0) * 2.0
    assert out3.shape == x3.shape
    assert jnp.allclose(out3, ref3, atol=1e-6), "mismatch vs reference (tiny)"

    print("KERNEL_OK")
</pallas_src>

<mosaic_0001>
module attributes {stable_mosaic.version = 11 : i64} {
  func.func @_addrelu_kernel(%arg0: i32, %arg1: memref<16x128xf32, #tpu.memory_space<vmem>>, %arg2: memref<16x128xf32, #tpu.memory_space<vmem>>) attributes {dimension_semantics = [#tpu.dimension_semantics<parallel>], iteration_bounds = array<i64: 1>, scalar_prefetch = 0 : i64, scratch_operands = 0 : i64, tpu.core_type = #tpu.core_type<tc>, window_params = [{transform_indices = @transform_0, window_bounds = array<i64: 16, 128>}, {transform_indices = @transform_1, window_bounds = array<i64: 16, 128>}]} {
    %c0 = arith.constant 0 : index
    %c0_0 = arith.constant 0 : index
    %0 = vector.load %arg1[%c0, %c0_0] : memref<16x128xf32, #tpu.memory_space<vmem>>, vector<16x128xf32>
    %cst = arith.constant 1.000000e+00 : f32
    %1 = vector.broadcast %cst : f32 to vector<16x128xf32>
    %2 = arith.addf %0, %1 : vector<16x128xf32>
    %cst_1 = arith.constant 0.000000e+00 : f32
    %3 = vector.broadcast %cst_1 : f32 to vector<16x128xf32>
    %4 = arith.maximumf %2, %3 : vector<16x128xf32>
    %5 = arith.addf %4, %4 : vector<16x128xf32>
    %c0_2 = arith.constant 0 : index
    %c0_3 = arith.constant 0 : index
    %6 = vector.load %arg2[%c0_2, %c0_3] : memref<16x128xf32, #tpu.memory_space<vmem>>, vector<16x128xf32>
    tpu.vector_store %arg2[%c0_2, %c0_3], %5 {strides = array<i32>} : memref<16x128xf32, #tpu.memory_space<vmem>>, vector<16x128xf32>,
    return
  }
  func.func @transform_0(%arg0: i32) -> (i32, i32) {
    %c0_i32 = arith.constant 0 : i32
    %c0_i32_0 = arith.constant 0 : i32
    return %arg0, %c0_i32 : i32, i32
  }
  func.func @transform_1(%arg0: i32) -> (i32, i32) {
    %c0_i32 = arith.constant 0 : i32
    %c0_i32_0 = arith.constant 0 : i32
    return %arg0, %c0_i32 : i32, i32
  }
}

</mosaic_0001>

<llo_original>
// kernel: model_forward.1
$region0: #{model_forward.1}
  #allocation0 [shape = 'u32[]', space=smem, size = 0x4, offset = 0x4, fixed_abs, tag = 'smem constant byte address 0x4 - core index']
  #allocation1 [shape = 'u32[72,128]{1,0:T(1,128)}', space=vmem, size = 0x9000, scoped, tag = 'internal scratch']
  %s0 = inlined_call_operand.vmem [shape: f32[16,128], index: 0, kind: input, shape index: {}]
  %s1 = inlined_call_operand.vmem [shape: f32[16,128], index: 1, kind: output, shape index: {}]
  %s2 = sld [smem:[#allocation0]]
  $region14: #{model_forward.1} parent=0
    _
  %s4 = ssub.s32 1, %s2
  %s5 = scalar_select 0, %s4, %s2
  // Predicated region
  $region2: #{model_forward.1} parent=0 // pred_check
    _
  $region3: #{model_forward.1} parent=0 // pred_check_branch
    %7 = sbr.rel (0) target = $region5
  $region4: #{model_forward.1} parent=0 // pred_region
    _
  $region5: #{model_forward.1} parent=0 // pred_fallthru
    _
  %v8 = vld [vmem:[%s0] sm:$0xff]
  %v9 = vld [vmem:[%s0 + $0x8] sm:$0xff]
  %v10 = vadd.f32 %v8, 1.0
  %v11 = vadd.f32 %v9, 1.0
  %v12 = vmax.f32 %v10, 0.0
  %v13 = vmax.f32 %v11, 0.0
  %v14 = vadd.f32 %v12, %v12
  %v15 = vadd.f32 %v13, %v13
  %16 = vst [vmem:[%s1] sm:$0xff] %v14
  %17 = vst [vmem:[%s1 + $0x8] sm:$0xff] %v15
  // Predicated region
  $region6: #{model_forward.1} parent=0 // pred_check
    _
  $region7: #{model_forward.1} parent=0 // pred_check_branch
    %19 = sbr.rel (0) target = $region9
  $region8: #{model_forward.1} parent=0 // pred_region
    _
  $region9: #{model_forward.1} parent=0 // pred_fallthru
    _
  // Predicated region
  $region10: #{model_forward.1} parent=0 // pred_check
    _
  $region11: #{model_forward.1} parent=0 // pred_check_branch
    %21 = sbr.rel (0) target = $region13
  $region12: #{model_forward.1} parent=0 // pred_region
    _
  $region13: #{model_forward.1} parent=0 // pred_fallthru
    _

</llo_original>
